<compile_context>
chip_gen: v6e
topology: v6e:2x2x1
jax: 0.10.0
libtpu: 0.0.40
codegen_flags: <defaults>
</compile_context>

<pallas_src>
import jax
import jax.numpy as jnp
from jax.experimental import pallas as pl
from jax.experimental.pallas import tpu as pltpu

INPUT_DIM = 17
HIDDEN = 128
OUT_DIM = 4
MIN_WIDTH = 3.0
MAX_WIDTH = 30.0
BN_EPS = 1e-5


def _round_up(n, m):
    return ((n + m - 1) // m) * m


def _grid_config():
    """(dimension_semantics, is_multicore_chip).

    v7x has 2 TensorCores per chip; only CORE_PARALLEL actually shards the
    grid across them.  On 1-TC chips (v5e/v6e) PARALLEL is a safe no-op.
    """
    try:
        kind = jax.devices()[0].device_kind.lower()
    except Exception:
        kind = ""
    if ("v7" in kind) or ("tpu7" in kind):
        return (pltpu.CORE_PARALLEL,), True
    return (pltpu.PARALLEL,), False


# --------------------------------------------------------------------------
# Kernel
# --------------------------------------------------------------------------
def _mlp_kernel(x_ref, w1_ref, w2_ref, consts_ref, o_ref):
    x = x_ref[...]                                 # [TB, 17] bf16
    consts = consts_ref[...]                       # [8, 128] f32
    shift1 = consts[0:1, :]                        # folded b1 + BN1
    shift2 = consts[1:2, :]                        # folded b2 + BN2
    w3_rows = consts[2:2 + OUT_DIM, :]             # [4, 128] f32 output weights
    b3 = consts[6:7, 0:OUT_DIM]                    # [1, 4]  f32 output bias

    mxu_dtype = w1_ref.dtype                       # bf16 storage for weights

    # ---- Layer 1: (Linear + folded BatchNorm) -> ReLU ---------------------
    h1 = jnp.dot(x, w1_ref[...],
                 preferred_element_type=jnp.float32)          # [TB, 128] f32
    h1 = jnp.maximum(h1 + shift1, 0.0)

    # ---- Layer 2: (Linear + folded BatchNorm) -> ReLU ---------------------
    h2 = jnp.dot(h1.astype(mxu_dtype), w2_ref[...],
                 preferred_element_type=jnp.float32)          # [TB, 128] f32
    h2 = jnp.maximum(h2 + shift2, 0.0)

    # ---- Output layer: Linear(128 -> 4), on VPU + XLU (not MXU) -----------
    # N=4 would waste 97% of MXU lanes yet cost a full vmatmul N-tile; four
    # broadcast multiplies + lane reductions use VALU/XLU slack instead.
    raw_cols = [
        jnp.sum(h2 * w3_rows[j:j + 1, :], axis=-1, keepdims=True)   # [TB, 1]
        for j in range(OUT_DIM)
    ]
    raw = jnp.concatenate(raw_cols, axis=-1) + b3                   # [TB, 4]

    widths = MIN_WIDTH + jax.nn.sigmoid(raw) * (MAX_WIDTH - MIN_WIDTH)

    # size factor from input feature column 6 (area feature).  x is bf16 so
    # this carries ~0.4% relative error on the factor (accepted; the bf16
    # weights already dominate the overall error budget).
    size_factor = 1.0 + x[:, 6:7].astype(jnp.float32) * 2.0          # [TB, 1]
    widths = widths * size_factor

    o_ref[...] = widths.astype(o_ref.dtype)


# --------------------------------------------------------------------------
# Wrapper
# --------------------------------------------------------------------------
def symmetric_mlp_forward(x, folded_params, *, max_tile_b=4096):
    """x: [B, 17] float32 (or bf16). Returns [B, 4] float32 widths."""
    w1f, w2f, consts = folded_params
    B = x.shape[0]
    mxu_dtype = w1f.dtype

    dim_sem, multicore = _grid_config()

    # Pick a batch tile: whole batch (rounded to 16 rows for clean bf16
    # (16,128) tiling) if small, else ~max_tile_b rows per grid step.
    b16 = _round_up(max(B, 16), 16)
    num_tiles = int(pl.cdiv(b16, max_tile_b))
    if multicore and num_tiles == 1 and b16 >= 32:
        num_tiles = 2            # give both TensorCores work under CORE_PARALLEL
    tile_b = _round_up(-(-b16 // num_tiles), 16)
    bp = tile_b * num_tiles

    # Pre-cast x to bf16 (bit-identical matmul input; halves the HBM stream).
    x_in = x.astype(mxu_dtype)
    if bp != B:
        x_in = jnp.pad(x_in, ((0, bp - B), (0, 0)))

    out = pl.pallas_call(
        _mlp_kernel,
        out_shape=jax.ShapeDtypeStruct((bp, OUT_DIM), jnp.float32),
        grid=(num_tiles,),
        in_specs=[
            # batch-tiled input: [TILE_B, 17] bf16 per grid step
            pl.BlockSpec((tile_b, INPUT_DIM), lambda i: (i, 0)),
            # weights / consts: constant block index -> VMEM-resident
            pl.BlockSpec((INPUT_DIM, HIDDEN), lambda i: (0, 0)),   # w1 folded
            pl.BlockSpec((HIDDEN, HIDDEN), lambda i: (0, 0)),      # w2 folded
            pl.BlockSpec((8, HIDDEN), lambda i: (0, 0)),           # shifts/w3/b3
        ],
        out_specs=pl.BlockSpec((tile_b, OUT_DIM), lambda i: (i, 0)),
        compiler_params=pltpu.CompilerParams(dimension_semantics=dim_sem),
    )(x_in, w1f, w2f, consts)

    return out if bp == B else out[:B]


# --------------------------------------------------------------------------
# Parameters (mirroring SymmetricAdaptiveMLP._initialize_weights)
# --------------------------------------------------------------------------
def init_raw_params(key):
    """PyTorch-layout raw parameters.

    Linear weights: kaiming_normal fan_out for relu -> std = sqrt(2 / fan_out);
    output layer N(0, 0.1); linear biases 0 except output bias [.5,.8,.6,.7];
    BatchNorm1d: gamma=1, beta=0, running_mean=0, running_var=1.
    """
    k1, k2, k3 = jax.random.split(key, 3)
    std = (2.0 / HIDDEN) ** 0.5
    return dict(
        w1=jax.random.normal(k1, (HIDDEN, INPUT_DIM), jnp.float32) * std,
        b1=jnp.zeros((HIDDEN,), jnp.float32),
        bn1_gamma=jnp.ones((HIDDEN,), jnp.float32),
        bn1_beta=jnp.zeros((HIDDEN,), jnp.float32),
        bn1_mean=jnp.zeros((HIDDEN,), jnp.float32),
        bn1_var=jnp.ones((HIDDEN,), jnp.float32),
        w2=jax.random.normal(k2, (HIDDEN, HIDDEN), jnp.float32) * std,
        b2=jnp.zeros((HIDDEN,), jnp.float32),
        bn2_gamma=jnp.ones((HIDDEN,), jnp.float32),
        bn2_beta=jnp.zeros((HIDDEN,), jnp.float32),
        bn2_mean=jnp.zeros((HIDDEN,), jnp.float32),
        bn2_var=jnp.ones((HIDDEN,), jnp.float32),
        w3=jax.random.normal(k3, (OUT_DIM, HIDDEN), jnp.float32) * 0.1,
        b3=jnp.array([0.5, 0.8, 0.6, 0.7], jnp.float32),
    )


def fold_params(raw, mxu_dtype=jnp.bfloat16):
    """Fold bias + eval-mode BatchNorm into the weights and pack all small
    vectors into a single (8,128) f32 operand (done once, off the hot path)."""
    s1 = raw["bn1_gamma"] / jnp.sqrt(raw["bn1_var"] + BN_EPS)
    sh1 = raw["b1"] * s1 + raw["bn1_beta"] - raw["bn1_mean"] * s1
    w1f = (raw["w1"].T * s1[None, :]).astype(mxu_dtype)            # [17, 128]

    s2 = raw["bn2_gamma"] / jnp.sqrt(raw["bn2_var"] + BN_EPS)
    sh2 = raw["b2"] * s2 + raw["bn2_beta"] - raw["bn2_mean"] * s2
    w2f = (raw["w2"].T * s2[None, :]).astype(mxu_dtype)            # [128, 128]

    consts = jnp.zeros((8, HIDDEN), jnp.float32)
    consts = consts.at[0].set(sh1.astype(jnp.float32))             # shift1
    consts = consts.at[1].set(sh2.astype(jnp.float32))             # shift2
    consts = consts.at[2:2 + OUT_DIM].set(raw["w3"].astype(jnp.float32))
    consts = consts.at[6, :OUT_DIM].set(raw["b3"].astype(jnp.float32))
    return (w1f, w2f, consts)


# --------------------------------------------------------------------------
# References
# --------------------------------------------------------------------------
def _reference_f32(x, raw):
    """Pure-JAX f32 reference with full module (eval) semantics."""
    z1 = x @ raw["w1"].T + raw["b1"]
    z1 = (z1 - raw["bn1_mean"]) / jnp.sqrt(raw["bn1_var"] + BN_EPS) \
        * raw["bn1_gamma"] + raw["bn1_beta"]
    h1 = jnp.maximum(z1, 0.0)
    z2 = h1 @ raw["w2"].T + raw["b2"]
    z2 = (z2 - raw["bn2_mean"]) / jnp.sqrt(raw["bn2_var"] + BN_EPS) \
        * raw["bn2_gamma"] + raw["bn2_beta"]
    h2 = jnp.maximum(z2, 0.0)
    rawo = h2 @ raw["w3"].T + raw["b3"]
    widths = MIN_WIDTH + jax.nn.sigmoid(rawo) * (MAX_WIDTH - MIN_WIDTH)
    return widths * (1.0 + x[:, 6:7] * 2.0)


def _reference_matched(x, folded):
    """Pure-JAX reference doing the same bf16-operand / f32-accumulate math
    as the kernel (bf16 x, bf16 weights for layers 1/2, f32 layer 3)."""
    w1f, w2f, consts = folded
    xb = x.astype(w1f.dtype)
    sh1, sh2 = consts[0:1, :], consts[1:2, :]
    w3_rows = consts[2:2 + OUT_DIM, :]
    b3 = consts[6:7, 0:OUT_DIM]
    h1 = jnp.maximum(jnp.dot(xb, w1f,
                             preferred_element_type=jnp.float32) + sh1, 0.0)
    h2 = jnp.maximum(jnp.dot(h1.astype(w1f.dtype), w2f,
                             preferred_element_type=jnp.float32) + sh2, 0.0)
    rawo = h2 @ w3_rows.T + b3
    widths = MIN_WIDTH + jax.nn.sigmoid(rawo) * (MAX_WIDTH - MIN_WIDTH)
    size_factor = 1.0 + xb[:, 6:7].astype(jnp.float32) * 2.0
    return widths * size_factor


# --------------------------------------------------------------------------
# Self-test
# --------------------------------------------------------------------------
if __name__ == "__main__":
    key = jax.random.PRNGKey(0)
    kx, kp = jax.random.split(key)

    raw = init_raw_params(kp)
    folded = fold_params(raw)

    # Small-batch check (single grid step on 1-TC chips).
    B = 8
    x = jax.random.normal(kx, (B, INPUT_DIM), jnp.float32)
    out = jax.block_until_ready(symmetric_mlp_forward(x, folded))
    assert out.shape == (B, OUT_DIM)
    # Tight check vs. a reference doing identical bf16/f32 math.
    assert jnp.allclose(out, _reference_matched(x, folded), atol=1e-2, rtol=1e-3)
    # Looser check vs. the full-precision module semantics (bf16 weights/x).
    assert jnp.allclose(out, _reference_f32(x, raw), atol=0.5, rtol=0.05)

    # Multi-tile check: exercises the batch grid, resident weights and the
    # row-padding / final-slice path (B=300 -> 5 tiles of 64 rows).
    B2 = 300
    x2 = jax.random.normal(jax.random.fold_in(kx, 1), (B2, INPUT_DIM),
                           jnp.float32)
    out2 = jax.block_until_ready(
        symmetric_mlp_forward(x2, folded, max_tile_b=64))
    assert out2.shape == (B2, OUT_DIM)
    assert jnp.allclose(out2, _reference_matched(x2, folded),
                        atol=1e-2, rtol=1e-3)
    assert jnp.allclose(out2, _reference_f32(x2, raw), atol=0.5, rtol=0.05)

    print("KERNEL_OK")
</pallas_src>

<mosaic_0001>
module attributes {stable_mosaic.version = 11 : i64} {
  func.func @_mlp_kernel(%arg0: i32, %arg1: memref<16x17xbf16, #tpu.memory_space<vmem>>, %arg2: memref<17x128xbf16, #tpu.memory_space<vmem>>, %arg3: memref<128x128xbf16, #tpu.memory_space<vmem>>, %arg4: memref<8x128xf32, #tpu.memory_space<vmem>>, %arg5: memref<16x4xf32, #tpu.memory_space<vmem>>) attributes {dimension_semantics = [#tpu.dimension_semantics<parallel>], iteration_bounds = array<i64: 1>, scalar_prefetch = 0 : i64, scratch_operands = 0 : i64, tpu.core_type = #tpu.core_type<tc>, window_params = [{transform_indices = @transform_0, window_bounds = array<i64: 16, 17>}, {pipeline_mode = #tpu.pipeline_mode<synchronous>, transform_indices = @transform_1, window_bounds = array<i64: 17, 128>}, {pipeline_mode = #tpu.pipeline_mode<synchronous>, transform_indices = @transform_2, window_bounds = array<i64: 128, 128>}, {pipeline_mode = #tpu.pipeline_mode<synchronous>, transform_indices = @transform_3, window_bounds = array<i64: 8, 128>}, {transform_indices = @transform_4, window_bounds = array<i64: 16, 4>}]} {
    %c0 = arith.constant 0 : index
    %c0_0 = arith.constant 0 : index
    %0 = vector.load %arg1[%c0, %c0_0] : memref<16x17xbf16, #tpu.memory_space<vmem>>, vector<16x17xbf16>
    %c0_1 = arith.constant 0 : index
    %c0_2 = arith.constant 0 : index
    %1 = vector.load %arg4[%c0_1, %c0_2] : memref<8x128xf32, #tpu.memory_space<vmem>>, vector<8x128xf32>
    %2 = vector.extract_strided_slice %1 {offsets = [0, 0], sizes = [1, 128], strides = [1, 1]} : vector<8x128xf32> to vector<1x128xf32>
    %3 = vector.extract_strided_slice %1 {offsets = [1, 0], sizes = [1, 128], strides = [1, 1]} : vector<8x128xf32> to vector<1x128xf32>
    %4 = vector.extract_strided_slice %1 {offsets = [2, 0], sizes = [4, 128], strides = [1, 1]} : vector<8x128xf32> to vector<4x128xf32>
    %5 = vector.extract_strided_slice %1 {offsets = [6, 0], sizes = [1, 4], strides = [1, 1]} : vector<8x128xf32> to vector<1x4xf32>
    %c0_3 = arith.constant 0 : index
    %c0_4 = arith.constant 0 : index
    %6 = vector.load %arg2[%c0_3, %c0_4] : memref<17x128xbf16, #tpu.memory_space<vmem>>, vector<17x128xbf16>
    %cst = arith.constant dense<0.000000e+00> : vector<16x128xf32>
    %7 = tpu.matmul %0, %6, %cst {dimension_numbers = #tpu.dot_dimension_numbers<[1], [0], [0], [1], [0, 0, 1, 1], [], []>} : vector<16x17xbf16>, vector<17x128xbf16>, vector<16x128xf32> -> vector<16x128xf32>
    %8 = vector.broadcast %2 : vector<1x128xf32> to vector<16x128xf32>
    %9 = arith.addf %7, %8 : vector<16x128xf32>
    %cst_5 = arith.constant 0.000000e+00 : f32
    %10 = vector.broadcast %cst_5 : f32 to vector<16x128xf32>
    %11 = arith.maximumf %9, %10 : vector<16x128xf32>
    %12 = arith.truncf %11 : vector<16x128xf32> to vector<16x128xbf16>
    %c0_6 = arith.constant 0 : index
    %c0_7 = arith.constant 0 : index
    %13 = vector.load %arg3[%c0_6, %c0_7] : memref<128x128xbf16, #tpu.memory_space<vmem>>, vector<128x128xbf16>
    %cst_8 = arith.constant dense<0.000000e+00> : vector<16x128xf32>
    %14 = tpu.matmul %12, %13, %cst_8 {dimension_numbers = #tpu.dot_dimension_numbers<[1], [0], [0], [1], [0, 0, 1, 1], [], []>} : vector<16x128xbf16>, vector<128x128xbf16>, vector<16x128xf32> -> vector<16x128xf32>
    %15 = vector.broadcast %3 : vector<1x128xf32> to vector<16x128xf32>
    %16 = arith.addf %14, %15 : vector<16x128xf32>
    %cst_9 = arith.constant 0.000000e+00 : f32
    %17 = vector.broadcast %cst_9 : f32 to vector<16x128xf32>
    %18 = arith.maximumf %16, %17 : vector<16x128xf32>
    %19 = vector.extract_strided_slice %4 {offsets = [0, 0], sizes = [1, 128], strides = [1, 1]} : vector<4x128xf32> to vector<1x128xf32>
    %20 = vector.broadcast %19 : vector<1x128xf32> to vector<16x128xf32>
    %21 = arith.mulf %18, %20 : vector<16x128xf32>
    %cst_10 = arith.constant dense<0.000000e+00> : vector<16xf32>
    %22 = vector.multi_reduction <add>, %21, %cst_10 [1] : vector<16x128xf32> to vector<16xf32>
    %23 = vector.shape_cast %22 : vector<16xf32> to vector<16x1xf32>
    %24 = vector.extract_strided_slice %4 {offsets = [1, 0], sizes = [1, 128], strides = [1, 1]} : vector<4x128xf32> to vector<1x128xf32>
    %25 = vector.broadcast %24 : vector<1x128xf32> to vector<16x128xf32>
    %26 = arith.mulf %18, %25 : vector<16x128xf32>
    %cst_11 = arith.constant dense<0.000000e+00> : vector<16xf32>
    %27 = vector.multi_reduction <add>, %26, %cst_11 [1] : vector<16x128xf32> to vector<16xf32>
    %28 = vector.shape_cast %27 : vector<16xf32> to vector<16x1xf32>
    %29 = vector.extract_strided_slice %4 {offsets = [2, 0], sizes = [1, 128], strides = [1, 1]} : vector<4x128xf32> to vector<1x128xf32>
    %30 = vector.broadcast %29 : vector<1x128xf32> to vector<16x128xf32>
    %31 = arith.mulf %18, %30 : vector<16x128xf32>
    %cst_12 = arith.constant dense<0.000000e+00> : vector<16xf32>
    %32 = vector.multi_reduction <add>, %31, %cst_12 [1] : vector<16x128xf32> to vector<16xf32>
    %33 = vector.shape_cast %32 : vector<16xf32> to vector<16x1xf32>
    %34 = vector.extract_strided_slice %4 {offsets = [3, 0], sizes = [1, 128], strides = [1, 1]} : vector<4x128xf32> to vector<1x128xf32>
    %35 = vector.broadcast %34 : vector<1x128xf32> to vector<16x128xf32>
    %36 = arith.mulf %18, %35 : vector<16x128xf32>
    %cst_13 = arith.constant dense<0.000000e+00> : vector<16xf32>
    %37 = vector.multi_reduction <add>, %36, %cst_13 [1] : vector<16x128xf32> to vector<16xf32>
    %38 = vector.shape_cast %37 : vector<16xf32> to vector<16x1xf32>
    %39 = tpu.concatenate %23, %28, %33, %38 in 1 : vector<16x1xf32>, vector<16x1xf32>, vector<16x1xf32>, vector<16x1xf32> -> vector<16x4xf32>
    %40 = vector.broadcast %5 : vector<1x4xf32> to vector<16x4xf32>
    %41 = arith.addf %39, %40 : vector<16x4xf32>
    %42 = arith.negf %41 : vector<16x4xf32>
    %43 = math.exp %42 : vector<16x4xf32>
    %cst_14 = arith.constant 1.000000e+00 : f32
    %44 = vector.broadcast %cst_14 : f32 to vector<16x4xf32>
    %45 = arith.addf %44, %43 : vector<16x4xf32>
    %46 = arith.divf %44, %45 : vector<16x4xf32>
    %cst_15 = arith.constant 2.700000e+01 : f32
    %47 = vector.broadcast %cst_15 : f32 to vector<16x4xf32>
    %48 = arith.mulf %46, %47 : vector<16x4xf32>
    %cst_16 = arith.constant 3.000000e+00 : f32
    %49 = vector.broadcast %cst_16 : f32 to vector<16x4xf32>
    %50 = arith.addf %49, %48 : vector<16x4xf32>
    %51 = vector.extract_strided_slice %0 {offsets = [0, 6], sizes = [16, 1], strides = [1, 1]} : vector<16x17xbf16> to vector<16x1xbf16>
    %52 = arith.extf %51 : vector<16x1xbf16> to vector<16x1xf32>
    %cst_17 = arith.constant 2.000000e+00 : f32
    %53 = vector.broadcast %cst_17 : f32 to vector<16x1xf32>
    %54 = arith.mulf %52, %53 : vector<16x1xf32>
    %cst_18 = arith.constant 1.000000e+00 : f32
    %55 = vector.broadcast %cst_18 : f32 to vector<16x1xf32>
    %56 = arith.addf %55, %54 : vector<16x1xf32>
    %57 = vector.broadcast %56 : vector<16x1xf32> to vector<16x4xf32>
    %58 = arith.mulf %50, %57 : vector<16x4xf32>
    %c0_19 = arith.constant 0 : index
    %c0_20 = arith.constant 0 : index
    %59 = vector.load %arg5[%c0_19, %c0_20] : memref<16x4xf32, #tpu.memory_space<vmem>>, vector<16x4xf32>
    tpu.vector_store %arg5[%c0_19, %c0_20], %58 {strides = array<i32>} : memref<16x4xf32, #tpu.memory_space<vmem>>, vector<16x4xf32>,
    return
  }
  func.func @transform_0(%arg0: i32) -> (i32, i32) {
    %c0_i32 = arith.constant 0 : i32
    %c0_i32_0 = arith.constant 0 : i32
    return %arg0, %c0_i32 : i32, i32
  }
  func.func @transform_1(%arg0: i32) -> (i32, i32) {
    %c0_i32 = arith.constant 0 : i32
    %c0_i32_0 = arith.constant 0 : i32
    %c0_i32_1 = arith.constant 0 : i32
    return %c0_i32, %c0_i32_0 : i32, i32
  }
  func.func @transform_2(%arg0: i32) -> (i32, i32) {
    %c0_i32 = arith.constant 0 : i32
    %c0_i32_0 = arith.constant 0 : i32
    %c0_i32_1 = arith.constant 0 : i32
    return %c0_i32, %c0_i32_0 : i32, i32
  }
  func.func @transform_3(%arg0: i32) -> (i32, i32) {
    %c0_i32 = arith.constant 0 : i32
    %c0_i32_0 = arith.constant 0 : i32
    %c0_i32_1 = arith.constant 0 : i32
    return %c0_i32, %c0_i32_0 : i32, i32
  }
  func.func @transform_4(%arg0: i32) -> (i32, i32) {
    %c0_i32 = arith.constant 0 : i32
    %c0_i32_0 = arith.constant 0 : i32
    return %arg0, %c0_i32 : i32, i32
  }
}

</mosaic_0001>

<llo_original>
// kernel: tpu_custom_call.1
$region0: #{tpu_custom_call.1}
  #allocation0 [shape = 'u32[]', space=smem, size = 0x4, offset = 0x4, fixed_abs, tag = 'smem constant byte address 0x4 - core index']
  #allocation1 [shape = 'u32[144,128]{1,0:T(1,128)}', space=vmem, size = 0x12000, scoped, tag = 'internal scratch']
  %s0 = inlined_call_operand.hbm [shape: bf16[16,17], index: 0, kind: input, shape index: {}]
  %s1 = inlined_call_operand.hbm [shape: bf16[17,128], index: 1, kind: input, shape index: {}]
  %s2 = inlined_call_operand.hbm [shape: bf16[128,128], index: 2, kind: input, shape index: {}]
  %s3 = inlined_call_operand.hbm [shape: f32[8,128], index: 3, kind: input, shape index: {}]
  %s4 = inlined_call_operand.vmem [shape: f32[16,4], index: 4, kind: output, shape index: {}]
  %s5 = sld [smem:[#allocation0]]
  $region42: #{tpu_custom_call.1} parent=0
    _
  %s7 = ssub.s32 1, %s5
  %s8 = scalar_select 0, %s7, %s5
  $region1: #{tpu_custom_call.1} parent=0
    #allocation2 [shape = 'u8[4096]{0}', space=vmem, size = 0x1000, scoped, tag = 'input window, operand 0, single buffered']
    #allocation3 [shape = 's32[1]{0}', space=sflag, size = 0x4, scoped, tag = 'scoped memory for tpu_custom_call.1']
    #allocation4 [shape = 'u8[6144]{0}', space=vmem, size = 0x1800, scoped, tag = 'input window, operand 1, single buffered']
    #allocation5 [shape = 's32[1]{0}', space=sflag, size = 0x4, scoped, tag = 'scoped memory for tpu_custom_call.1']
    #allocation6 [shape = 'u8[32768]{0}', space=vmem, size = 0x8000, scoped, tag = 'input window, operand 2, single buffered']
    #allocation7 [shape = 'u8[4096]{0}', space=vmem, size = 0x1000, scoped, tag = 'input window, operand 3, single buffered']
    #allocation8 [shape = 's32[1]{0}', space=sflag, size = 0x4, scoped, tag = 'scoped memory for tpu_custom_call.1']
    %9 = vsyncpa [#allocation3], 0
    %10 = vsyncpa [#allocation5], 0
    %11 = vsyncpa [#allocation8], 0
    // Predicated region
    $region2: #{tpu_custom_call.1} parent=1 // pred_check
      _
    $region3: #{tpu_custom_call.1} parent=1 // pred_check_branch
      %13 = sbr.rel (0) target = $region5
    $region4: #{tpu_custom_call.1} parent=1 // pred_region
      %s15 = ssub.s32 128, 128
      %16 = vsyncadd [#allocation3], %s15
      %s17 = sshll.u32 [#allocation2], 4
      %s18 = int_to_ptr.vmem [resolvable:$true] %s17
      %23 = dma.hbm_to_vmem [thread:$0]  %s0, 128, %s18, [#allocation3], 64, 64, 4
    $region5: #{tpu_custom_call.1} parent=1 // pred_fallthru
      _
    // Predicated region
    $region6: #{tpu_custom_call.1} parent=1 // pred_check
      _
    $region7: #{tpu_custom_call.1} parent=1 // pred_check_branch
      %25 = sbr.rel (0) target = $region9
    $region8: #{tpu_custom_call.1} parent=1 // pred_region
      %s27 = ssub.s32 192, 192
      %28 = vsyncadd [#allocation5], %s27
      %s29 = sshll.u32 [#allocation4], 4
      %s30 = int_to_ptr.vmem [resolvable:$true] %s29
      %35 = dma.hbm_to_vmem [thread:$0]  %s1, 192, %s30, [#allocation5], 64, 64, 4
    $region9: #{tpu_custom_call.1} parent=1 // pred_fallthru
      _
    // Predicated region
    $region10: #{tpu_custom_call.1} parent=1 // pred_check
      _
    $region11: #{tpu_custom_call.1} parent=1 // pred_check_branch
      %37 = sbr.rel (0) target = $region13
    $region12: #{tpu_custom_call.1} parent=1 // pred_region
      %s39 = ssub.s32 1024, 1024
      %40 = vsyncadd [#allocation5], %s39
      %s41 = sshll.u32 [#allocation6], 4
      %s42 = int_to_ptr.vmem [resolvable:$true] %s41
      %47 = dma.hbm_to_vmem [thread:$0]  %s2, 1024, %s42, [#allocation5], 64, 64, 4
    $region13: #{tpu_custom_call.1} parent=1 // pred_fallthru
      _
    // Predicated region
    $region14: #{tpu_custom_call.1} parent=1 // pred_check
      _
    $region15: #{tpu_custom_call.1} parent=1 // pred_check_branch
      %49 = sbr.rel (0) target = $region17
    $region16: #{tpu_custom_call.1} parent=1 // pred_region
      %s51 = ssub.s32 128, 128
      %52 = vsyncadd [#allocation8], %s51
      %s54 = sshll.u32 [#allocation7], 4
      %s55 = int_to_ptr.vmem [resolvable:$true] %s54
      %57 = dma.hbm_to_vmem [thread:$0]  %s3, 128, %s55, [#allocation8]
    $region17: #{tpu_custom_call.1} parent=1 // pred_fallthru
      _
    // Predicated region
    $region18: #{tpu_custom_call.1} parent=1 // pred_check
      _
    $region19: #{tpu_custom_call.1} parent=1 // pred_check_branch
      %59 = sbr.rel (0) target = $region21
    $region20: #{tpu_custom_call.1} parent=1 // pred_region
      %60 = dma.done [#allocation3], 128
    $region21: #{tpu_custom_call.1} parent=1 // pred_fallthru
      _
    // Predicated region
    $region22: #{tpu_custom_call.1} parent=1 // pred_check
      _
    $region23: #{tpu_custom_call.1} parent=1 // pred_check_branch
      %62 = sbr.rel (0) target = $region25
    $region24: #{tpu_custom_call.1} parent=1 // pred_region
      %63 = dma.done [#allocation5], 192
    $region25: #{tpu_custom_call.1} parent=1 // pred_fallthru
      _
    // Predicated region
    $region26: #{tpu_custom_call.1} parent=1 // pred_check
      _
    $region27: #{tpu_custom_call.1} parent=1 // pred_check_branch
      %65 = sbr.rel (0) target = $region29
    $region28: #{tpu_custom_call.1} parent=1 // pred_region
      %66 = dma.done [#allocation5], 1024
    $region29: #{tpu_custom_call.1} parent=1 // pred_fallthru
      _
    // Predicated region
    $region30: #{tpu_custom_call.1} parent=1 // pred_check
      _
    $region31: #{tpu_custom_call.1} parent=1 // pred_check_branch
      %68 = sbr.rel (0) target = $region33
    $region32: #{tpu_custom_call.1} parent=1 // pred_region
      %69 = dma.done [#allocation8], 128
    $region33: #{tpu_custom_call.1} parent=1 // pred_fallthru
      _
    %v71 = vld [vmem:[#allocation2] sm:$0xf]
    %v72 = vld [vmem:[#allocation2 + $0x4] sm:$0xf]
    %v73 = vld [vmem:[#allocation7] sm:$0xff]
    %v74 = vld [vmem:[#allocation4] sm:$0xf]
    %v75 = vld [vmem:[#allocation4 + $0x4] sm:$0xf]
    %v76 = vld [vmem:[#allocation4 + $0x8] sm:$0x1]
    %v77 = vlaneseq
    %v78 = vshrl.u32 %v77, 7
    %v79 = vsub.s32 0, %v78
    %v80 = vrot.slane %v73, %v79
    %v83 = vunpack.c.l.b16 %v71
    %v84 = vunpack.c.l.b16 %v72
    %v85 = vpack.c.b16 %v84, %v83
    %v89 = vunpack.c.l.b16 %v74
    %v90 = vunpack.c.l.b16 %v75
    %v91 = vunpack.c.l.b16 %v76
    %v92 = vpack.c.b16 %v90, %v89
    %v93 = vpack.c.b16 %v91, %v91
    %vm95 = vcmask 138240
    %v97 = vsel %vm95, %v85, 0
    %vm99 = vcmask 1040384
    %v100 = vsel 0, 4294967295, 65535
    %v101 = vsel %vm99, %v100, 0
    %v103 = vand.u32 %v93, %v101
    %105 = vmatprep.subr.bf16.mxu0 0
    %106 = vmatpush1.bf16.msra.mxu0 0
    %107 = vmatprep.subr.bf16.mxu0 0
    %108 = vmatpush1.bf16.msra.mxu0 0
    %109 = vmatprep.subr.bf16.mxu0 0
    %110 = vmatpush1.bf16.msra.mxu0 0
    %111 = vmatprep.subr.bf16.mxu0 0
    %112 = vmatpush1.bf16.msra.mxu0 0
    %113 = vmatprep.subr.bf16.mxu0 0
    %114 = vmatpush1.bf16.msra.mxu0 0
    %115 = vmatprep.subr.bf16.mxu0 0
    %116 = vmatpush1.bf16.msra.mxu0 0
    %117 = vmatprep.subr.bf16.mxu0 0
    %118 = vmatpush1.bf16.msra.mxu0 %v103
    %119 = vmatprep.subr.bf16.mxu0 0
    %120 = vmatpush1.bf16.msra.mxu0 %v92
    %121 = vmatprep.subr.bf16.mxu0 0
    %122 = vmatpush2.bf16.msra.mxu0 0
    %123 = vmatprep.subr.bf16.mxu0 0
    %124 = vmatpush2.bf16.msra.mxu0 0
    %125 = vmatprep.subr.bf16.mxu0 0
    %126 = vmatpush2.bf16.msra.mxu0 0
    %127 = vmatprep.subr.bf16.mxu0 0
    %128 = vmatpush2.bf16.msra.mxu0 0
    %129 = vmatprep.subr.bf16.mxu0 0
    %130 = vmatpush2.bf16.msra.mxu0 0
    %131 = vmatprep.subr.bf16.mxu0 0
    %132 = vmatpush2.bf16.msra.mxu0 0
    %133 = vmatprep.subr.bf16.mxu0 0
    %134 = vmatpush2.bf16.msra.mxu0 0
    %135 = vmatprep.subr.bf16.mxu0 0
    %136 = vmatpush2.bf16.msra.mxu0 0
    %137 = vmatprep.mubr.bf16.mxu0 0
    %138 = vmatmul.mubr.bf16.gmra.mxu0 %v97
    %v139 = vpop.f32.mrf.mxu0
    %v140 = vadd.f32 %v80, %v139
    %v141 = vpop.f32.mrf.mxu0
    %v142 = vpop.f32.mrf.mxu0
    %v143 = vadd.f32 %v80, %v142
    %v144 = vpop.f32.mrf.mxu0
    %145 = vdwg.mxu0
    %v146 = vmax.f32 %v140, 0.0
    %v147 = vmax.f32 %v143, 0.0
    %v148 = vpack.c.bf16 %v147, %v146
    %v149 = vld [vmem:[#allocation6] sm:$0xf]
    %v150 = vld [vmem:[#allocation6 + $0x4] sm:$0xf]
    %v151 = vld [vmem:[#allocation6 + $0x8] sm:$0xf]
    %v152 = vld [vmem:[#allocation6 + $0xc] sm:$0xf]
    %v153 = vld [vmem:[#allocation6 + $0x10] sm:$0xf]
    %v154 = vld [vmem:[#allocation6 + $0x14] sm:$0xf]
    %v155 = vld [vmem:[#allocation6 + $0x18] sm:$0xf]
    %v156 = vld [vmem:[#allocation6 + $0x1c] sm:$0xf]
    %v157 = vld [vmem:[#allocation6 + $0x20] sm:$0xf]
    %v158 = vld [vmem:[#allocation6 + $0x24] sm:$0xf]
    %v159 = vld [vmem:[#allocation6 + $0x28] sm:$0xf]
    %v160 = vld [vmem:[#allocation6 + $0x2c] sm:$0xf]
    %v161 = vld [vmem:[#allocation6 + $0x30] sm:$0xf]
    %v162 = vld [vmem:[#allocation6 + $0x34] sm:$0xf]
    %v163 = vld [vmem:[#allocation6 + $0x38] sm:$0xf]
    %v164 = vld [vmem:[#allocation6 + $0x3c] sm:$0xf]
    %v165 = vlaneseq
    %v166 = vshrl.u32 %v165, 7
    %v167 = vsub.s32 1, %v166
    %v168 = vrot.slane %v73, %v167
    %v185 = vunpack.c.l.b16 %v149
    %v186 = vunpack.c.l.b16 %v150
    %v187 = vunpack.c.l.b16 %v151
    %v188 = vunpack.c.l.b16 %v152
    %v189 = vunpack.c.l.b16 %v153
    %v190 = vunpack.c.l.b16 %v154
    %v191 = vunpack.c.l.b16 %v155
    %v192 = vunpack.c.l.b16 %v156
    %v193 = vunpack.c.l.b16 %v157
    %v194 = vunpack.c.l.b16 %v158
    %v195 = vunpack.c.l.b16 %v159
    %v196 = vunpack.c.l.b16 %v160
    %v197 = vunpack.c.l.b16 %v161
    %v198 = vunpack.c.l.b16 %v162
    %v199 = vunpack.c.l.b16 %v163
    %v200 = vunpack.c.l.b16 %v164
    %v201 = vpack.c.b16 %v186, %v185
    %v202 = vpack.c.b16 %v188, %v187
    %v203 = vpack.c.b16 %v190, %v189
    %v204 = vpack.c.b16 %v192, %v191
    %v205 = vpack.c.b16 %v194, %v193
    %v206 = vpack.c.b16 %v196, %v195
    %v207 = vpack.c.b16 %v198, %v197
    %v208 = vpack.c.b16 %v200, %v199
    %217 = vmatprep.subr.bf16.mxu0 0
    %218 = vmatpush1.bf16.msra.mxu0 %v208
    %219 = vmatprep.subr.bf16.mxu0 0
    %220 = vmatpush1.bf16.msra.mxu0 %v207
    %221 = vmatprep.subr.bf16.mxu0 0
    %222 = vmatpush1.bf16.msra.mxu0 %v206
    %223 = vmatprep.subr.bf16.mxu0 0
    %224 = vmatpush1.bf16.msra.mxu0 %v205
    %225 = vmatprep.subr.bf16.mxu0 0
    %226 = vmatpush1.bf16.msra.mxu0 %v204
    %227 = vmatprep.subr.bf16.mxu0 0
    %228 = vmatpush1.bf16.msra.mxu0 %v203
    %229 = vmatprep.subr.bf16.mxu0 0
    %230 = vmatpush1.bf16.msra.mxu0 %v202
    %231 = vmatprep.subr.bf16.mxu0 0
    %232 = vmatpush1.bf16.msra.mxu0 %v201
    %233 = vmatprep.subr.bf16.mxu0 0
    %234 = vmatpush2.bf16.msra.mxu0 0
    %235 = vmatprep.subr.bf16.mxu0 0
    %236 = vmatpush2.bf16.msra.mxu0 0
    %237 = vmatprep.subr.bf16.mxu0 0
    %238 = vmatpush2.bf16.msra.mxu0 0
    %239 = vmatprep.subr.bf16.mxu0 0
    %240 = vmatpush2.bf16.msra.mxu0 0
    %241 = vmatprep.subr.bf16.mxu0 0
    %242 = vmatpush2.bf16.msra.mxu0 0
    %243 = vmatprep.subr.bf16.mxu0 0
    %244 = vmatpush2.bf16.msra.mxu0 0
    %245 = vmatprep.subr.bf16.mxu0 0
    %246 = vmatpush2.bf16.msra.mxu0 0
    %247 = vmatprep.subr.bf16.mxu0 0
    %248 = vmatpush2.bf16.msra.mxu0 0
    %249 = vmatprep.mubr.bf16.mxu0 0
    %250 = vmatmul.mubr.bf16.gmra.mxu0 %v148
    %v251 = vpop.f32.mrf.mxu0
    %v252 = vadd.f32 %v168, %v251
    %v253 = vpop.f32.mrf.mxu0
    %v254 = vpop.f32.mrf.mxu0
    %v255 = vadd.f32 %v168, %v254
    %v256 = vpop.f32.mrf.mxu0
    %257 = vdwg.mxu0
    %v258 = vmax.f32 %v252, 0.0
    %v259 = vmax.f32 %v255, 0.0
    %v260 = vlaneseq
    %v261 = vshrl.u32 %v260, 7
    %v262 = vsub.s32 2, %v261
    %v263 = vrot.slane %v73, %v262
    %v264 = vmul.f32 %v258, %v263
    %v265 = vmul.f32 %v259, %v263
    %266 = vadd.xlane.f32.xlu0 %v264
    %v267 = vpop.xlane.xlu0 %266
    %268 = vadd.xlane.f32.xlu0 %v265
    %v269 = vpop.xlane.xlu0 %268
    %v270 = vlaneseq
    %v271 = vshrl.u32 %v270, 7
    %v272 = vsub.s32 3, %v271
    %v273 = vrot.slane %v73, %v272
    %v274 = vmul.f32 %v258, %v273
    %v275 = vmul.f32 %v259, %v273
    %276 = vadd.xlane.f32.xlu0 %v274
    %v277 = vpop.xlane.xlu0 %276
    %278 = vadd.xlane.f32.xlu0 %v275
    %v279 = vpop.xlane.xlu0 %278
    %v280 = vlaneseq
    %v281 = vshrl.u32 %v280, 7
    %v282 = vsub.s32 4, %v281
    %v283 = vrot.slane %v73, %v282
    %v284 = vmul.f32 %v258, %v283
    %v285 = vmul.f32 %v259, %v283
    %286 = vadd.xlane.f32.xlu0 %v284
    %v287 = vpop.xlane.xlu0 %286
    %288 = vadd.xlane.f32.xlu0 %v285
    %v289 = vpop.xlane.xlu0 %288
    %v290 = vlaneseq
    %v291 = vshrl.u32 %v290, 7
    %v292 = vsub.s32 5, %v291
    %v293 = vrot.slane %v73, %v292
    %v294 = vmul.f32 %v258, %v293
    %v295 = vmul.f32 %v259, %v293
    %296 = vadd.xlane.f32.xlu0 %v294
    %v297 = vpop.xlane.xlu0 %296
    %298 = vadd.xlane.f32.xlu0 %v295
    %v299 = vpop.xlane.xlu0 %298
    %vm300 = vcmask 7168
    %v301 = vsel %vm300, %v267, %v277
    %v302 = vsel %vm300, %v269, %v279
    %vm303 = vcmask 15360
    %v304 = vsel %vm303, %v301, %v287
    %v305 = vsel %vm303, %v302, %v289
    %vm306 = vcmask 23552
    %v307 = vsel %vm306, %v304, %v297
    %v308 = vsel %vm306, %v305, %v299
    %v309 = vlaneseq
    %v310 = vshrl.u32 %v309, 7
    %v311 = vsub.s32 6, %v310
    %v312 = vrot.slane %v73, %v311
    %v313 = vadd.f32 %v307, %v312
    %v314 = vadd.f32 %v308, %v312
    %v315 = vxor.u32 %v313, 2147483648
    %v316 = vxor.u32 %v314, 2147483648
    %v317 = vmul.f32 %v315, 1.442695
    %v318 = vpow.pop %v317
    %v319 = vmul.f32 %v316, 1.442695
    %v320 = vpow.pop %v319
    %v321 = vadd.f32 %v318, 1.0
    %v322 = vadd.f32 %v320, 1.0
    %v323 = vrcp.pop %v321
    %v324 = vmul.f32 1.0, %v323
    %v325 = vrcp.pop %v322
    %v326 = vmul.f32 1.0, %v325
    %v327 = vmul.f32 %v324, 27.0
    %v328 = vmul.f32 %v326, 27.0
    %v329 = vadd.f32 %v327, 3.0
    %v330 = vadd.f32 %v328, 3.0
    %v331 = vunpack.c.l.bf16 %v71
    %v332 = vunpack.c.l.bf16 %v72
    %v333 = vmul.f32 %v331, 2.0
    %v334 = vmul.f32 %v332, 2.0
    %v335 = vadd.f32 %v333, 1.0
    %v336 = vadd.f32 %v334, 1.0
    %338 = vset.pattern.permute.xlu0 6
    %339 = vperm.xlu0 %338, %v335
    %v340 = vpop.permute.xlu0 %339
    %343 = vset.pattern.permute.xlu0 6
    %344 = vperm.xlu0 %343, %v336
    %v345 = vpop.permute.xlu0 %344
    %v347 = vmul.f32 %v329, %v340
    %v348 = vmul.f32 %v330, %v345
    %vm349 = vcmask 31744
    %350 = vst.msk [vmem:[%s4] sm:$0xff] %vm349, %v347
    %351 = vst.msk [vmem:[%s4 + $0x8] sm:$0xff] %vm349, %v348
    // Predicated region
    $region34: #{tpu_custom_call.1} parent=1 // pred_check
      _
    $region35: #{tpu_custom_call.1} parent=1 // pred_check_branch
      %353 = sbr.rel (0) target = $region37
    $region36: #{tpu_custom_call.1} parent=1 // pred_region
      _
    $region37: #{tpu_custom_call.1} parent=1 // pred_fallthru
      _
    // Predicated region
    $region38: #{tpu_custom_call.1} parent=1 // pred_check
      _
    $region39: #{tpu_custom_call.1} parent=1 // pred_check_branch
      %355 = sbr.rel (0) target = $region41
    $region40: #{tpu_custom_call.1} parent=1 // pred_region
      _
    $region41: #{tpu_custom_call.1} parent=1 // pred_fallthru
      _
    %356 = vsyncpa [#allocation3], 1
    %357 = vsyncpa [#allocation5], 1
    %358 = vsyncpa [#allocation8], 1

</llo_original>
